<compile_context>
chip_gen: v5e
topology: v5e:2x2
jax: 0.10.0
libtpu: 0.0.40
codegen_flags: <defaults>
</compile_context>

<pallas_src>
import math

import jax
import jax.numpy as jnp
from jax.experimental import pallas as pl
from jax.experimental.pallas import tpu as pltpu


def _lstm_kernel(x_ref, w_ih_ref, w_hh_ref, b_ref, out_ref,
                 xproj_scr, h_scr, c_scr):
    """Whole-sequence LSTM in one kernel invocation.

    x_ref     : (S*Bp, I)   inputs, time-major rows flattened as (t*Bp + b)
    w_ih_ref  : (I, 4H)     input->gates weight (transposed)
    w_hh_ref  : (H, 4H)     hidden->gates weight (transposed)
    b_ref     : (1, 4H)     combined bias (b_ih + b_hh)
    out_ref   : (S*Bp, 1)   hidden-state column 0 per (t, b)
    xproj_scr : (S*Bp, 4H)  f32 VMEM scratch: x @ W_ih^T + b for all steps
    h_scr     : (Bp, H)     f32 hidden state (persists across loop iters)
    c_scr     : (Bp, H)     f32 cell state
    """
    bp, hidden = h_scr.shape
    seq = x_ref.shape[0] // bp

    # --- Hoisted off the serial path: one big MXU matmul for every
    # timestep's input projection, with the bias folded in once. ---
    xproj_scr[...] = (
        jnp.dot(x_ref[...], w_ih_ref[...], preferred_element_type=jnp.float32)
        + b_ref[...]
    )

    h_scr[...] = jnp.zeros_like(h_scr)
    c_scr[...] = jnp.zeros_like(c_scr)

    def step(t, carry):
        row = pl.multiple_of(t * bp, bp)
        h_prev = h_scr[...]
        c_prev = c_scr[...]

        # Single matmul per step on the critical (serial) recurrence path.
        gates = xproj_scr[pl.ds(row, bp), :] + jnp.dot(
            h_prev, w_hh_ref[...], preferred_element_type=jnp.float32)

        # PyTorch gate ordering: input, forget, cell(g), output.
        # NOTE: with hidden=32 these are 32-lane sub-slices of one 128-lane
        # vreg; for production sizes pick hidden as a multiple of 128 so the
        # splits are vreg-aligned.
        i_g = jax.nn.sigmoid(gates[:, 0 * hidden:1 * hidden])
        f_g = jax.nn.sigmoid(gates[:, 1 * hidden:2 * hidden])
        g_g = jnp.tanh(gates[:, 2 * hidden:3 * hidden])
        o_g = jax.nn.sigmoid(gates[:, 3 * hidden:4 * hidden])

        c_new = f_g * c_prev + i_g * g_g
        h_new = o_g * jnp.tanh(c_new)

        c_scr[...] = c_new
        h_scr[...] = h_new
        # Only column 0 of the hidden state is consumed downstream; store
        # just that column (VMEM-resident output, one HBM writeback at end).
        out_ref[pl.ds(row, bp), :] = h_new[:, 0:1]
        return carry

    unroll = seq if seq <= 16 else 8
    jax.lax.fori_loop(0, seq, step, 0, unroll=unroll)


def surrogate_lstm_forward(x, w_ih, w_hh, b_ih, b_hh):
    """x: (seq, batch, input_size) f32.  Returns (seq, batch, 1)."""
    seq_len, batch, input_size = x.shape
    hidden = w_hh.shape[1]
    assert w_ih.shape == (4 * hidden, input_size)
    assert w_hh.shape == (4 * hidden, hidden)

    # Pad batch to the f32 sublane tile (8) so every vreg row is useful.
    bp = max(8, ((batch + 7) // 8) * 8)
    x_p = jnp.zeros((seq_len, bp, input_size), jnp.float32)
    x_p = x_p.at[:, :batch, :].set(x.astype(jnp.float32))
    x2 = x_p.reshape(seq_len * bp, input_size)          # time-major rows

    # Pre-transpose weights so the kernel does (B,I)@(I,4H) and (B,H)@(H,4H).
    w_ih_t = jnp.asarray(w_ih.T, jnp.float32)            # (I, 4H)
    w_hh_t = jnp.asarray(w_hh.T, jnp.float32)            # (H, 4H)
    bias = jnp.asarray((b_ih + b_hh)[None, :], jnp.float32)  # (1, 4H)

    out2d = pl.pallas_call(
        _lstm_kernel,
        out_shape=jax.ShapeDtypeStruct((seq_len * bp, 1), jnp.float32),
        grid_spec=pltpu.PrefetchScalarGridSpec(
            num_scalar_prefetch=0,
            grid=(1,),  # single invocation; recurrence runs inside the kernel
            in_specs=[
                pl.BlockSpec((seq_len * bp, input_size), lambda i: (0, 0)),
                pl.BlockSpec((input_size, 4 * hidden), lambda i: (0, 0)),
                pl.BlockSpec((hidden, 4 * hidden), lambda i: (0, 0)),
                pl.BlockSpec((1, 4 * hidden), lambda i: (0, 0)),
            ],
            out_specs=pl.BlockSpec((seq_len * bp, 1), lambda i: (0, 0)),
            scratch_shapes=[
                pltpu.VMEM((seq_len * bp, 4 * hidden), jnp.float32),  # xproj+b
                pltpu.VMEM((bp, hidden), jnp.float32),                # h state
                pltpu.VMEM((bp, hidden), jnp.float32),                # c state
            ],
        ),
        compiler_params=pltpu.CompilerParams(
            dimension_semantics=("arbitrary",),
        ),
    )(x2, w_ih_t, w_hh_t, bias)

    # (seq*Bp, 1) -> (seq, batch, 1)   == output[:, :, 0].unsqueeze(2)
    return out2d.reshape(seq_len, bp, 1)[:, :batch, :]


def make_params(key, input_size, hidden_size):
    """Deterministic PyTorch-style LSTM init: U(-1/sqrt(H), 1/sqrt(H))."""
    k = 1.0 / math.sqrt(hidden_size)
    k1, k2, k3, k4 = jax.random.split(key, 4)
    w_ih = jax.random.uniform(k1, (4 * hidden_size, input_size),
                              jnp.float32, -k, k)
    w_hh = jax.random.uniform(k2, (4 * hidden_size, hidden_size),
                              jnp.float32, -k, k)
    b_ih = jax.random.uniform(k3, (4 * hidden_size,), jnp.float32, -k, k)
    b_hh = jax.random.uniform(k4, (4 * hidden_size,), jnp.float32, -k, k)
    return w_ih, w_hh, b_ih, b_hh


def _reference_lstm(x, w_ih, w_hh, b_ih, b_hh, hidden):
    """Pure-JAX reference for correctness checking."""
    def step(carry, x_t):
        h, c = carry
        gates = x_t @ w_ih.T + h @ w_hh.T + b_ih + b_hh
        i = jax.nn.sigmoid(gates[:, 0 * hidden:1 * hidden])
        f = jax.nn.sigmoid(gates[:, 1 * hidden:2 * hidden])
        g = jnp.tanh(gates[:, 2 * hidden:3 * hidden])
        o = jax.nn.sigmoid(gates[:, 3 * hidden:4 * hidden])
        c = f * c + i * g
        h = o * jnp.tanh(c)
        return (h, c), h

    batch = x.shape[1]
    h0 = jnp.zeros((batch, hidden), jnp.float32)
    c0 = jnp.zeros((batch, hidden), jnp.float32)
    _, outs = jax.lax.scan(step, (h0, c0), x)
    return outs[:, :, 0:1]


if __name__ == "__main__":
    seq_len, batch, input_size, hidden_size = 8, 2, 16, 32

    key = jax.random.PRNGKey(0)
    kx, kp = jax.random.split(key)
    x = jax.random.normal(kx, (seq_len, batch, input_size), jnp.float32)
    w_ih, w_hh, b_ih, b_hh = make_params(kp, input_size, hidden_size)

    out = surrogate_lstm_forward(x, w_ih, w_hh, b_ih, b_hh)
    out = jax.block_until_ready(out)

    ref = _reference_lstm(x, w_ih, w_hh, b_ih, b_hh, hidden_size)
    assert out.shape == (seq_len, batch, 1), out.shape
    assert jnp.allclose(out, ref, atol=1e-4, rtol=1e-4), "mismatch vs reference"

    print("KERNEL_OK")
</pallas_src>

<mosaic_0001>
module attributes {stable_mosaic.version = 11 : i64} {
  func.func @_lstm_kernel(%arg0: i32, %arg1: memref<64x16xf32, #tpu.memory_space<vmem>>, %arg2: memref<16x128xf32, #tpu.memory_space<vmem>>, %arg3: memref<32x128xf32, #tpu.memory_space<vmem>>, %arg4: memref<1x128xf32, #tpu.memory_space<vmem>>, %arg5: memref<64x1xf32, #tpu.memory_space<vmem>>, %arg6: memref<64x128xf32, #tpu.memory_space<vmem>>, %arg7: memref<8x32xf32, #tpu.memory_space<vmem>>, %arg8: memref<8x32xf32, #tpu.memory_space<vmem>>) attributes {dimension_semantics = [#tpu.dimension_semantics<arbitrary>], iteration_bounds = array<i64: 1>, scalar_prefetch = 0 : i64, scratch_operands = 3 : i64, tpu.core_type = #tpu.core_type<tc>, window_params = [{pipeline_mode = #tpu.pipeline_mode<synchronous>, transform_indices = @transform_0, window_bounds = array<i64: 64, 16>}, {pipeline_mode = #tpu.pipeline_mode<synchronous>, transform_indices = @transform_1, window_bounds = array<i64: 16, 128>}, {pipeline_mode = #tpu.pipeline_mode<synchronous>, transform_indices = @transform_2, window_bounds = array<i64: 32, 128>}, {pipeline_mode = #tpu.pipeline_mode<synchronous>, transform_indices = @transform_3, window_bounds = array<i64: 1, 128>}, {pipeline_mode = #tpu.pipeline_mode<synchronous>, transform_indices = @transform_4, window_bounds = array<i64: 64, 1>}]} {
    %c0 = arith.constant 0 : index
    %c0_0 = arith.constant 0 : index
    %0 = vector.load %arg1[%c0, %c0_0] : memref<64x16xf32, #tpu.memory_space<vmem>>, vector<64x16xf32>
    %c0_1 = arith.constant 0 : index
    %c0_2 = arith.constant 0 : index
    %1 = vector.load %arg2[%c0_1, %c0_2] : memref<16x128xf32, #tpu.memory_space<vmem>>, vector<16x128xf32>
    %cst = arith.constant dense<0.000000e+00> : vector<64x128xf32>
    %2 = tpu.matmul %0, %1, %cst {dimension_numbers = #tpu.dot_dimension_numbers<[1], [0], [0], [1], [0, 0, 1, 1], [], []>} : vector<64x16xf32>, vector<16x128xf32>, vector<64x128xf32> -> vector<64x128xf32>
    %c0_3 = arith.constant 0 : index
    %c0_4 = arith.constant 0 : index
    %3 = vector.load %arg4[%c0_3, %c0_4] : memref<1x128xf32, #tpu.memory_space<vmem>>, vector<1x128xf32>
    %4 = vector.broadcast %3 : vector<1x128xf32> to vector<64x128xf32>
    %5 = arith.addf %2, %4 : vector<64x128xf32>
    %c0_5 = arith.constant 0 : index
    %c0_6 = arith.constant 0 : index
    %6 = vector.load %arg6[%c0_5, %c0_6] : memref<64x128xf32, #tpu.memory_space<vmem>>, vector<64x128xf32>
    tpu.vector_store %arg6[%c0_5, %c0_6], %5 {strides = array<i32>} : memref<64x128xf32, #tpu.memory_space<vmem>>, vector<64x128xf32>,
    %cst_7 = arith.constant 0.000000e+00 : f32
    %7 = vector.broadcast %cst_7 : f32 to vector<8x32xf32>
    %c0_8 = arith.constant 0 : index
    %c0_9 = arith.constant 0 : index
    %8 = vector.load %arg7[%c0_8, %c0_9] : memref<8x32xf32, #tpu.memory_space<vmem>>, vector<8x32xf32>
    tpu.vector_store %arg7[%c0_8, %c0_9], %7 {strides = array<i32>} : memref<8x32xf32, #tpu.memory_space<vmem>>, vector<8x32xf32>,
    %cst_10 = arith.constant 0.000000e+00 : f32
    %9 = vector.broadcast %cst_10 : f32 to vector<8x32xf32>
    %c0_11 = arith.constant 0 : index
    %c0_12 = arith.constant 0 : index
    %10 = vector.load %arg8[%c0_11, %c0_12] : memref<8x32xf32, #tpu.memory_space<vmem>>, vector<8x32xf32>
    tpu.vector_store %arg8[%c0_11, %c0_12], %9 {strides = array<i32>} : memref<8x32xf32, #tpu.memory_space<vmem>>, vector<8x32xf32>,
    %c0_i32 = arith.constant 0 : i32
    %c8_i32 = arith.constant 8 : i32
    %11 = arith.muli %c0_i32, %c8_i32 : i32
    %12 = tpu.assume_multiple %11, 8 : i32
    %c0_13 = arith.constant 0 : index
    %c0_14 = arith.constant 0 : index
    %13 = vector.load %arg7[%c0_13, %c0_14] : memref<8x32xf32, #tpu.memory_space<vmem>>, vector<8x32xf32>
    %c0_15 = arith.constant 0 : index
    %c0_16 = arith.constant 0 : index
    %14 = vector.load %arg8[%c0_15, %c0_16] : memref<8x32xf32, #tpu.memory_space<vmem>>, vector<8x32xf32>
    %15 = arith.index_cast %12 : i32 to index
    %c0_17 = arith.constant 0 : index
    %16 = vector.load %arg6[%15, %c0_17] : memref<64x128xf32, #tpu.memory_space<vmem>>, vector<8x128xf32>
    %c0_18 = arith.constant 0 : index
    %c0_19 = arith.constant 0 : index
    %17 = vector.load %arg3[%c0_18, %c0_19] : memref<32x128xf32, #tpu.memory_space<vmem>>, vector<32x128xf32>
    %cst_20 = arith.constant dense<0.000000e+00> : vector<8x128xf32>
    %18 = tpu.matmul %13, %17, %cst_20 {dimension_numbers = #tpu.dot_dimension_numbers<[1], [0], [0], [1], [0, 0, 1, 1], [], []>} : vector<8x32xf32>, vector<32x128xf32>, vector<8x128xf32> -> vector<8x128xf32>
    %19 = arith.addf %16, %18 : vector<8x128xf32>
    %20 = vector.extract_strided_slice %19 {offsets = [0, 0], sizes = [8, 32], strides = [1, 1]} : vector<8x128xf32> to vector<8x32xf32>
    %21 = arith.negf %20 : vector<8x32xf32>
    %22 = math.exp %21 : vector<8x32xf32>
    %cst_21 = arith.constant 1.000000e+00 : f32
    %23 = vector.broadcast %cst_21 : f32 to vector<8x32xf32>
    %24 = arith.addf %23, %22 : vector<8x32xf32>
    %25 = arith.divf %23, %24 : vector<8x32xf32>
    %26 = vector.extract_strided_slice %19 {offsets = [0, 32], sizes = [8, 32], strides = [1, 1]} : vector<8x128xf32> to vector<8x32xf32>
    %27 = arith.negf %26 : vector<8x32xf32>
    %28 = math.exp %27 : vector<8x32xf32>
    %cst_22 = arith.constant 1.000000e+00 : f32
    %29 = vector.broadcast %cst_22 : f32 to vector<8x32xf32>
    %30 = arith.addf %29, %28 : vector<8x32xf32>
    %31 = arith.divf %29, %30 : vector<8x32xf32>
    %32 = vector.extract_strided_slice %19 {offsets = [0, 64], sizes = [8, 32], strides = [1, 1]} : vector<8x128xf32> to vector<8x32xf32>
    %33 = math.tanh %32 : vector<8x32xf32>
    %34 = vector.extract_strided_slice %19 {offsets = [0, 96], sizes = [8, 32], strides = [1, 1]} : vector<8x128xf32> to vector<8x32xf32>
    %35 = arith.negf %34 : vector<8x32xf32>
    %36 = math.exp %35 : vector<8x32xf32>
    %cst_23 = arith.constant 1.000000e+00 : f32
    %37 = vector.broadcast %cst_23 : f32 to vector<8x32xf32>
    %38 = arith.addf %37, %36 : vector<8x32xf32>
    %39 = arith.divf %37, %38 : vector<8x32xf32>
    %40 = arith.mulf %31, %14 : vector<8x32xf32>
    %41 = arith.mulf %25, %33 : vector<8x32xf32>
    %42 = arith.addf %40, %41 : vector<8x32xf32>
    %43 = math.tanh %42 : vector<8x32xf32>
    %44 = arith.mulf %39, %43 : vector<8x32xf32>
    %c0_24 = arith.constant 0 : index
    %c0_25 = arith.constant 0 : index
    %45 = vector.load %arg8[%c0_24, %c0_25] : memref<8x32xf32, #tpu.memory_space<vmem>>, vector<8x32xf32>
    tpu.vector_store %arg8[%c0_24, %c0_25], %42 {strides = array<i32>} : memref<8x32xf32, #tpu.memory_space<vmem>>, vector<8x32xf32>,
    %c0_26 = arith.constant 0 : index
    %c0_27 = arith.constant 0 : index
    %46 = vector.load %arg7[%c0_26, %c0_27] : memref<8x32xf32, #tpu.memory_space<vmem>>, vector<8x32xf32>
    tpu.vector_store %arg7[%c0_26, %c0_27], %44 {strides = array<i32>} : memref<8x32xf32, #tpu.memory_space<vmem>>, vector<8x32xf32>,
    %47 = vector.extract_strided_slice %44 {offsets = [0, 0], sizes = [8, 1], strides = [1, 1]} : vector<8x32xf32> to vector<8x1xf32>
    %48 = arith.index_cast %12 : i32 to index
    %c0_28 = arith.constant 0 : index
    %49 = vector.load %arg5[%48, %c0_28] : memref<64x1xf32, #tpu.memory_space<vmem>>, vector<8x1xf32>
    tpu.vector_store %arg5[%48, %c0_28], %47 {strides = array<i32>} : memref<64x1xf32, #tpu.memory_space<vmem>>, vector<8x1xf32>,
    %c1_i32 = arith.constant 1 : i32
    %c8_i32_29 = arith.constant 8 : i32
    %50 = arith.muli %c1_i32, %c8_i32_29 : i32
    %51 = tpu.assume_multiple %50, 8 : i32
    %c0_30 = arith.constant 0 : index
    %c0_31 = arith.constant 0 : index
    %52 = vector.load %arg7[%c0_30, %c0_31] : memref<8x32xf32, #tpu.memory_space<vmem>>, vector<8x32xf32>
    %c0_32 = arith.constant 0 : index
    %c0_33 = arith.constant 0 : index
    %53 = vector.load %arg8[%c0_32, %c0_33] : memref<8x32xf32, #tpu.memory_space<vmem>>, vector<8x32xf32>
    %54 = arith.index_cast %51 : i32 to index
    %c0_34 = arith.constant 0 : index
    %55 = vector.load %arg6[%54, %c0_34] : memref<64x128xf32, #tpu.memory_space<vmem>>, vector<8x128xf32>
    %c0_35 = arith.constant 0 : index
    %c0_36 = arith.constant 0 : index
    %56 = vector.load %arg3[%c0_35, %c0_36] : memref<32x128xf32, #tpu.memory_space<vmem>>, vector<32x128xf32>
    %cst_37 = arith.constant dense<0.000000e+00> : vector<8x128xf32>
    %57 = tpu.matmul %52, %56, %cst_37 {dimension_numbers = #tpu.dot_dimension_numbers<[1], [0], [0], [1], [0, 0, 1, 1], [], []>} : vector<8x32xf32>, vector<32x128xf32>, vector<8x128xf32> -> vector<8x128xf32>
    %58 = arith.addf %55, %57 : vector<8x128xf32>
    %59 = vector.extract_strided_slice %58 {offsets = [0, 0], sizes = [8, 32], strides = [1, 1]} : vector<8x128xf32> to vector<8x32xf32>
    %60 = arith.negf %59 : vector<8x32xf32>
    %61 = math.exp %60 : vector<8x32xf32>
    %cst_38 = arith.constant 1.000000e+00 : f32
    %62 = vector.broadcast %cst_38 : f32 to vector<8x32xf32>
    %63 = arith.addf %62, %61 : vector<8x32xf32>
    %64 = arith.divf %62, %63 : vector<8x32xf32>
    %65 = vector.extract_strided_slice %58 {offsets = [0, 32], sizes = [8, 32], strides = [1, 1]} : vector<8x128xf32> to vector<8x32xf32>
    %66 = arith.negf %65 : vector<8x32xf32>
    %67 = math.exp %66 : vector<8x32xf32>
    %cst_39 = arith.constant 1.000000e+00 : f32
    %68 = vector.broadcast %cst_39 : f32 to vector<8x32xf32>
    %69 = arith.addf %68, %67 : vector<8x32xf32>
    %70 = arith.divf %68, %69 : vector<8x32xf32>
    %71 = vector.extract_strided_slice %58 {offsets = [0, 64], sizes = [8, 32], strides = [1, 1]} : vector<8x128xf32> to vector<8x32xf32>
    %72 = math.tanh %71 : vector<8x32xf32>
    %73 = vector.extract_strided_slice %58 {offsets = [0, 96], sizes = [8, 32], strides = [1, 1]} : vector<8x128xf32> to vector<8x32xf32>
    %74 = arith.negf %73 : vector<8x32xf32>
    %75 = math.exp %74 : vector<8x32xf32>
    %cst_40 = arith.constant 1.000000e+00 : f32
    %76 = vector.broadcast %cst_40 : f32 to vector<8x32xf32>
    %77 = arith.addf %76, %75 : vector<8x32xf32>
    %78 = arith.divf %76, %77 : vector<8x32xf32>
    %79 = arith.mulf %70, %53 : vector<8x32xf32>
    %80 = arith.mulf %64, %72 : vector<8x32xf32>
    %81 = arith.addf %79, %80 : vector<8x32xf32>
    %82 = math.tanh %81 : vector<8x32xf32>
    %83 = arith.mulf %78, %82 : vector<8x32xf32>
    %c0_41 = arith.constant 0 : index
    %c0_42 = arith.constant 0 : index
    %84 = vector.load %arg8[%c0_41, %c0_42] : memref<8x32xf32, #tpu.memory_space<vmem>>, vector<8x32xf32>
    tpu.vector_store %arg8[%c0_41, %c0_42], %81 {strides = array<i32>} : memref<8x32xf32, #tpu.memory_space<vmem>>, vector<8x32xf32>,
    %c0_43 = arith.constant 0 : index
    %c0_44 = arith.constant 0 : index
    %85 = vector.load %arg7[%c0_43, %c0_44] : memref<8x32xf32, #tpu.memory_space<vmem>>, vector<8x32xf32>
    tpu.vector_store %arg7[%c0_43, %c0_44], %83 {strides = array<i32>} : memref<8x32xf32, #tpu.memory_space<vmem>>, vector<8x32xf32>,
    %86 = vector.extract_strided_slice %83 {offsets = [0, 0], sizes = [8, 1], strides = [1, 1]} : vector<8x32xf32> to vector<8x1xf32>
    %87 = arith.index_cast %51 : i32 to index
    %c0_45 = arith.constant 0 : index
    %88 = vector.load %arg5[%87, %c0_45] : memref<64x1xf32, #tpu.memory_space<vmem>>, vector<8x1xf32>
    tpu.vector_store %arg5[%87, %c0_45], %86 {strides = array<i32>} : memref<64x1xf32, #tpu.memory_space<vmem>>, vector<8x1xf32>,
    %c2_i32 = arith.constant 2 : i32
    %c8_i32_46 = arith.constant 8 : i32
    %89 = arith.muli %c2_i32, %c8_i32_46 : i32
    %90 = tpu.assume_multiple %89, 8 : i32
    %c0_47 = arith.constant 0 : index
    %c0_48 = arith.constant 0 : index
    %91 = vector.load %arg7[%c0_47, %c0_48] : memref<8x32xf32, #tpu.memory_space<vmem>>, vector<8x32xf32>
    %c0_49 = arith.constant 0 : index
    %c0_50 = arith.constant 0 : index
    %92 = vector.load %arg8[%c0_49, %c0_50] : memref<8x32xf32, #tpu.memory_space<vmem>>, vector<8x32xf32>
    %93 = arith.index_cast %90 : i32 to index
    %c0_51 = arith.constant 0 : index
    %94 = vector.load %arg6[%93, %c0_51] : memref<64x128xf32, #tpu.memory_space<vmem>>, vector<8x128xf32>
    %c0_52 = arith.constant 0 : index
    %c0_53 = arith.constant 0 : index
    %95 = vector.load %arg3[%c0_52, %c0_53] : memref<32x128xf32, #tpu.memory_space<vmem>>, vector<32x128xf32>
    %cst_54 = arith.constant dense<0.000000e+00> : vector<8x128xf32>
    %96 = tpu.matmul %91, %95, %cst_54 {dimension_numbers = #tpu.dot_dimension_numbers<[1], [0], [0], [1], [0, 0, 1, 1], [], []>} : vector<8x32xf32>, vector<32x128xf32>, vector<8x128xf32> -> vector<8x128xf32>
    %97 = arith.addf %94, %96 : vector<8x128xf32>
    %98 = vector.extract_strided_slice %97 {offsets = [0, 0], sizes = [8, 32], strides = [1, 1]} : vector<8x128xf32> to vector<8x32xf32>
    %99 = arith.negf %98 : vector<8x32xf32>
    %100 = math.exp %99 : vector<8x32xf32>
    %cst_55 = arith.constant 1.000000e+00 : f32
    %101 = vector.broadcast %cst_55 : f32 to vector<8x32xf32>
    %102 = arith.addf %101, %100 : vector<8x32xf32>
    %103 = arith.divf %101, %102 : vector<8x32xf32>
    %104 = vector.extract_strided_slice %97 {offsets = [0, 32], sizes = [8, 32], strides = [1, 1]} : vector<8x128xf32> to vector<8x32xf32>
    %105 = arith.negf %104 : vector<8x32xf32>
    %106 = math.exp %105 : vector<8x32xf32>
    %cst_56 = arith.constant 1.000000e+00 : f32
    %107 = vector.broadcast %cst_56 : f32 to vector<8x32xf32>
    %108 = arith.addf %107, %106 : vector<8x32xf32>
    %109 = arith.divf %107, %108 : vector<8x32xf32>
    %110 = vector.extract_strided_slice %97 {offsets = [0, 64], sizes = [8, 32], strides = [1, 1]} : vector<8x128xf32> to vector<8x32xf32>
    %111 = math.tanh %110 : vector<8x32xf32>
    %112 = vector.extract_strided_slice %97 {offsets = [0, 96], sizes = [8, 32], strides = [1, 1]} : vector<8x128xf32> to vector<8x32xf32>
    %113 = arith.negf %112 : vector<8x32xf32>
    %114 = math.exp %113 : vector<8x32xf32>
    %cst_57 = arith.constant 1.000000e+00 : f32
    %115 = vector.broadcast %cst_57 : f32 to vector<8x32xf32>
    %116 = arith.addf %115, %114 : vector<8x32xf32>
    %117 = arith.divf %115, %116 : vector<8x32xf32>
    %118 = arith.mulf %109, %92 : vector<8x32xf32>
    %119 = arith.mulf %103, %111 : vector<8x32xf32>
    %120 = arith.addf %118, %119 : vector<8x32xf32>
    %121 = math.tanh %120 : vector<8x32xf32>
    %122 = arith.mulf %117, %121 : vector<8x32xf32>
    %c0_58 = arith.constant 0 : index
    %c0_59 = arith.constant 0 : index
    %123 = vector.load %arg8[%c0_58, %c0_59] : memref<8x32xf32, #tpu.memory_space<vmem>>, vector<8x32xf32>
    tpu.vector_store %arg8[%c0_58, %c0_59], %120 {strides = array<i32>} : memref<8x32xf32, #tpu.memory_space<vmem>>, vector<8x32xf32>,
    %c0_60 = arith.constant 0 : index
    %c0_61 = arith.constant 0 : index
    %124 = vector.load %arg7[%c0_60, %c0_61] : memref<8x32xf32, #tpu.memory_space<vmem>>, vector<8x32xf32>
    tpu.vector_store %arg7[%c0_60, %c0_61], %122 {strides = array<i32>} : memref<8x32xf32, #tpu.memory_space<vmem>>, vector<8x32xf32>,
    %125 = vector.extract_strided_slice %122 {offsets = [0, 0], sizes = [8, 1], strides = [1, 1]} : vector<8x32xf32> to vector<8x1xf32>
    %126 = arith.index_cast %90 : i32 to index
    %c0_62 = arith.constant 0 : index
    %127 = vector.load %arg5[%126, %c0_62] : memref<64x1xf32, #tpu.memory_space<vmem>>, vector<8x1xf32>
    tpu.vector_store %arg5[%126, %c0_62], %125 {strides = array<i32>} : memref<64x1xf32, #tpu.memory_space<vmem>>, vector<8x1xf32>,
    %c3_i32 = arith.constant 3 : i32
    %c8_i32_63 = arith.constant 8 : i32
    %128 = arith.muli %c3_i32, %c8_i32_63 : i32
    %129 = tpu.assume_multiple %128, 8 : i32
    %c0_64 = arith.constant 0 : index
    %c0_65 = arith.constant 0 : index
    %130 = vector.load %arg7[%c0_64, %c0_65] : memref<8x32xf32, #tpu.memory_space<vmem>>, vector<8x32xf32>
    %c0_66 = arith.constant 0 : index
    %c0_67 = arith.constant 0 : index
    %131 = vector.load %arg8[%c0_66, %c0_67] : memref<8x32xf32, #tpu.memory_space<vmem>>, vector<8x32xf32>
    %132 = arith.index_cast %129 : i32 to index
    %c0_68 = arith.constant 0 : index
    %133 = vector.load %arg6[%132, %c0_68] : memref<64x128xf32, #tpu.memory_space<vmem>>, vector<8x128xf32>
    %c0_69 = arith.constant 0 : index
    %c0_70 = arith.constant 0 : index
    %134 = vector.load %arg3[%c0_69, %c0_70] : memref<32x128xf32, #tpu.memory_space<vmem>>, vector<32x128xf32>
    %cst_71 = arith.constant dense<0.000000e+00> : vector<8x128xf32>
    %135 = tpu.matmul %130, %134, %cst_71 {dimension_numbers = #tpu.dot_dimension_numbers<[1], [0], [0], [1], [0, 0, 1, 1], [], []>} : vector<8x32xf32>, vector<32x128xf32>, vector<8x128xf32> -> vector<8x128xf32>
    %136 = arith.addf %133, %135 : vector<8x128xf32>
    %137 = vector.extract_strided_slice %136 {offsets = [0, 0], sizes = [8, 32], strides = [1, 1]} : vector<8x128xf32> to vector<8x32xf32>
    %138 = arith.negf %137 : vector<8x32xf32>
    %139 = math.exp %138 : vector<8x32xf32>
    %cst_72 = arith.constant 1.000000e+00 : f32
    %140 = vector.broadcast %cst_72 : f32 to vector<8x32xf32>
    %141 = arith.addf %140, %139 : vector<8x32xf32>
    %142 = arith.divf %140, %141 : vector<8x32xf32>
    %143 = vector.extract_strided_slice %136 {offsets = [0, 32], sizes = [8, 32], strides = [1, 1]} : vector<8x128xf32> to vector<8x32xf32>
    %144 = arith.negf %143 : vector<8x32xf32>
    %145 = math.exp %144 : vector<8x32xf32>
    %cst_73 = arith.constant 1.000000e+00 : f32
    %146 = vector.broadcast %cst_73 : f32 to vector<8x32xf32>
    %147 = arith.addf %146, %145 : vector<8x32xf32>
    %148 = arith.divf %146, %147 : vector<8x32xf32>
    %149 = vector.extract_strided_slice %136 {offsets = [0, 64], sizes = [8, 32], strides = [1, 1]} : vector<8x128xf32> to vector<8x32xf32>
    %150 = math.tanh %149 : vector<8x32xf32>
    %151 = vector.extract_strided_slice %136 {offsets = [0, 96], sizes = [8, 32], strides = [1, 1]} : vector<8x128xf32> to vector<8x32xf32>
    %152 = arith.negf %151 : vector<8x32xf32>
    %153 = math.exp %152 : vector<8x32xf32>
    %cst_74 = arith.constant 1.000000e+00 : f32
    %154 = vector.broadcast %cst_74 : f32 to vector<8x32xf32>
    %155 = arith.addf %154, %153 : vector<8x32xf32>
    %156 = arith.divf %154, %155 : vector<8x32xf32>
    %157 = arith.mulf %148, %131 : vector<8x32xf32>
    %158 = arith.mulf %142, %150 : vector<8x32xf32>
    %159 = arith.addf %157, %158 : vector<8x32xf32>
    %160 = math.tanh %159 : vector<8x32xf32>
    %161 = arith.mulf %156, %160 : vector<8x32xf32>
    %c0_75 = arith.constant 0 : index
    %c0_76 = arith.constant 0 : index
    %162 = vector.load %arg8[%c0_75, %c0_76] : memref<8x32xf32, #tpu.memory_space<vmem>>, vector<8x32xf32>
    tpu.vector_store %arg8[%c0_75, %c0_76], %159 {strides = array<i32>} : memref<8x32xf32, #tpu.memory_space<vmem>>, vector<8x32xf32>,
    %c0_77 = arith.constant 0 : index
    %c0_78 = arith.constant 0 : index
    %163 = vector.load %arg7[%c0_77, %c0_78] : memref<8x32xf32, #tpu.memory_space<vmem>>, vector<8x32xf32>
    tpu.vector_store %arg7[%c0_77, %c0_78], %161 {strides = array<i32>} : memref<8x32xf32, #tpu.memory_space<vmem>>, vector<8x32xf32>,
    %164 = vector.extract_strided_slice %161 {offsets = [0, 0], sizes = [8, 1], strides = [1, 1]} : vector<8x32xf32> to vector<8x1xf32>
    %165 = arith.index_cast %129 : i32 to index
    %c0_79 = arith.constant 0 : index
    %166 = vector.load %arg5[%165, %c0_79] : memref<64x1xf32, #tpu.memory_space<vmem>>, vector<8x1xf32>
    tpu.vector_store %arg5[%165, %c0_79], %164 {strides = array<i32>} : memref<64x1xf32, #tpu.memory_space<vmem>>, vector<8x1xf32>,
    %c4_i32 = arith.constant 4 : i32
    %c8_i32_80 = arith.constant 8 : i32
    %167 = arith.muli %c4_i32, %c8_i32_80 : i32
    %168 = tpu.assume_multiple %167, 8 : i32
    %c0_81 = arith.constant 0 : index
    %c0_82 = arith.constant 0 : index
    %169 = vector.load %arg7[%c0_81, %c0_82] : memref<8x32xf32, #tpu.memory_space<vmem>>, vector<8x32xf32>
    %c0_83 = arith.constant 0 : index
    %c0_84 = arith.constant 0 : index
    %170 = vector.load %arg8[%c0_83, %c0_84] : memref<8x32xf32, #tpu.memory_space<vmem>>, vector<8x32xf32>
    %171 = arith.index_cast %168 : i32 to index
    %c0_85 = arith.constant 0 : index
    %172 = vector.load %arg6[%171, %c0_85] : memref<64x128xf32, #tpu.memory_space<vmem>>, vector<8x128xf32>
    %c0_86 = arith.constant 0 : index
    %c0_87 = arith.constant 0 : index
    %173 = vector.load %arg3[%c0_86, %c0_87] : memref<32x128xf32, #tpu.memory_space<vmem>>, vector<32x128xf32>
    %cst_88 = arith.constant dense<0.000000e+00> : vector<8x128xf32>
    %174 = tpu.matmul %169, %173, %cst_88 {dimension_numbers = #tpu.dot_dimension_numbers<[1], [0], [0], [1], [0, 0, 1, 1], [], []>} : vector<8x32xf32>, vector<32x128xf32>, vector<8x128xf32> -> vector<8x128xf32>
    %175 = arith.addf %172, %174 : vector<8x128xf32>
    %176 = vector.extract_strided_slice %175 {offsets = [0, 0], sizes = [8, 32], strides = [1, 1]} : vector<8x128xf32> to vector<8x32xf32>
    %177 = arith.negf %176 : vector<8x32xf32>
    %178 = math.exp %177 : vector<8x32xf32>
    %cst_89 = arith.constant 1.000000e+00 : f32
    %179 = vector.broadcast %cst_89 : f32 to vector<8x32xf32>
    %180 = arith.addf %179, %178 : vector<8x32xf32>
    %181 = arith.divf %179, %180 : vector<8x32xf32>
    %182 = vector.extract_strided_slice %175 {offsets = [0, 32], sizes = [8, 32], strides = [1, 1]} : vector<8x128xf32> to vector<8x32xf32>
    %183 = arith.negf %182 : vector<8x32xf32>
    %184 = math.exp %183 : vector<8x32xf32>
    %cst_90 = arith.constant 1.000000e+00 : f32
    %185 = vector.broadcast %cst_90 : f32 to vector<8x32xf32>
    %186 = arith.addf %185, %184 : vector<8x32xf32>
    %187 = arith.divf %185, %186 : vector<8x32xf32>
    %188 = vector.extract_strided_slice %175 {offsets = [0, 64], sizes = [8, 32], strides = [1, 1]} : vector<8x128xf32> to vector<8x32xf32>
    %189 = math.tanh %188 : vector<8x32xf32>
    %190 = vector.extract_strided_slice %175 {offsets = [0, 96], sizes = [8, 32], strides = [1, 1]} : vector<8x128xf32> to vector<8x32xf32>
    %191 = arith.negf %190 : vector<8x32xf32>
    %192 = math.exp %191 : vector<8x32xf32>
    %cst_91 = arith.constant 1.000000e+00 : f32
    %193 = vector.broadcast %cst_91 : f32 to vector<8x32xf32>
    %194 = arith.addf %193, %192 : vector<8x32xf32>
    %195 = arith.divf %193, %194 : vector<8x32xf32>
    %196 = arith.mulf %187, %170 : vector<8x32xf32>
    %197 = arith.mulf %181, %189 : vector<8x32xf32>
    %198 = arith.addf %196, %197 : vector<8x32xf32>
    %199 = math.tanh %198 : vector<8x32xf32>
    %200 = arith.mulf %195, %199 : vector<8x32xf32>
    %c0_92 = arith.constant 0 : index
    %c0_93 = arith.constant 0 : index
    %201 = vector.load %arg8[%c0_92, %c0_93] : memref<8x32xf32, #tpu.memory_space<vmem>>, vector<8x32xf32>
    tpu.vector_store %arg8[%c0_92, %c0_93], %198 {strides = array<i32>} : memref<8x32xf32, #tpu.memory_space<vmem>>, vector<8x32xf32>,
    %c0_94 = arith.constant 0 : index
    %c0_95 = arith.constant 0 : index
    %202 = vector.load %arg7[%c0_94, %c0_95] : memref<8x32xf32, #tpu.memory_space<vmem>>, vector<8x32xf32>
    tpu.vector_store %arg7[%c0_94, %c0_95], %200 {strides = array<i32>} : memref<8x32xf32, #tpu.memory_space<vmem>>, vector<8x32xf32>,
    %203 = vector.extract_strided_slice %200 {offsets = [0, 0], sizes = [8, 1], strides = [1, 1]} : vector<8x32xf32> to vector<8x1xf32>
    %204 = arith.index_cast %168 : i32 to index
    %c0_96 = arith.constant 0 : index
    %205 = vector.load %arg5[%204, %c0_96] : memref<64x1xf32, #tpu.memory_space<vmem>>, vector<8x1xf32>
    tpu.vector_store %arg5[%204, %c0_96], %203 {strides = array<i32>} : memref<64x1xf32, #tpu.memory_space<vmem>>, vector<8x1xf32>,
    %c5_i32 = arith.constant 5 : i32
    %c8_i32_97 = arith.constant 8 : i32
    %206 = arith.muli %c5_i32, %c8_i32_97 : i32
    %207 = tpu.assume_multiple %206, 8 : i32
    %c0_98 = arith.constant 0 : index
    %c0_99 = arith.constant 0 : index
    %208 = vector.load %arg7[%c0_98, %c0_99] : memref<8x32xf32, #tpu.memory_space<vmem>>, vector<8x32xf32>
    %c0_100 = arith.constant 0 : index
    %c0_101 = arith.constant 0 : index
    %209 = vector.load %arg8[%c0_100, %c0_101] : memref<8x32xf32, #tpu.memory_space<vmem>>, vector<8x32xf32>
    %210 = arith.index_cast %207 : i32 to index
    %c0_102 = arith.constant 0 : index
    %211 = vector.load %arg6[%210, %c0_102] : memref<64x128xf32, #tpu.memory_space<vmem>>, vector<8x128xf32>
    %c0_103 = arith.constant 0 : index
    %c0_104 = arith.constant 0 : index
    %212 = vector.load %arg3[%c0_103, %c0_104] : memref<32x128xf32, #tpu.memory_space<vmem>>, vector<32x128xf32>
    %cst_105 = arith.constant dense<0.000000e+00> : vector<8x128xf32>
    %213 = tpu.matmul %208, %212, %cst_105 {dimension_numbers = #tpu.dot_dimension_numbers<[1], [0], [0], [1], [0, 0, 1, 1], [], []>} : vector<8x32xf32>, vector<32x128xf32>, vector<8x128xf32> -> vector<8x128xf32>
    %214 = arith.addf %211, %213 : vector<8x128xf32>
    %215 = vector.extract_strided_slice %214 {offsets = [0, 0], sizes = [8, 32], strides = [1, 1]} : vector<8x128xf32> to vector<8x32xf32>
    %216 = arith.negf %215 : vector<8x32xf32>
    %217 = math.exp %216 : vector<8x32xf32>
    %cst_106 = arith.constant 1.000000e+00 : f32
    %218 = vector.broadcast %cst_106 : f32 to vector<8x32xf32>
    %219 = arith.addf %218, %217 : vector<8x32xf32>
    %220 = arith.divf %218, %219 : vector<8x32xf32>
    %221 = vector.extract_strided_slice %214 {offsets = [0, 32], sizes = [8, 32], strides = [1, 1]} : vector<8x128xf32> to vector<8x32xf32>
    %222 = arith.negf %221 : vector<8x32xf32>
    %223 = math.exp %222 : vector<8x32xf32>
    %cst_107 = arith.constant 1.000000e+00 : f32
    %224 = vector.broadcast %cst_107 : f32 to vector<8x32xf32>
    %225 = arith.addf %224, %223 : vector<8x32xf32>
    %226 = arith.divf %224, %225 : vector<8x32xf32>
    %227 = vector.extract_strided_slice %214 {offsets = [0, 64], sizes = [8, 32], strides = [1, 1]} : vector<8x128xf32> to vector<8x32xf32>
    %228 = math.tanh %227 : vector<8x32xf32>
    %229 = vector.extract_strided_slice %214 {offsets = [0, 96], sizes = [8, 32], strides = [1, 1]} : vector<8x128xf32> to vector<8x32xf32>
    %230 = arith.negf %229 : vector<8x32xf32>
    %231 = math.exp %230 : vector<8x32xf32>
    %cst_108 = arith.constant 1.000000e+00 : f32
    %232 = vector.broadcast %cst_108 : f32 to vector<8x32xf32>
    %233 = arith.addf %232, %231 : vector<8x32xf32>
    %234 = arith.divf %232, %233 : vector<8x32xf32>
    %235 = arith.mulf %226, %209 : vector<8x32xf32>
    %236 = arith.mulf %220, %228 : vector<8x32xf32>
    %237 = arith.addf %235, %236 : vector<8x32xf32>
    %238 = math.tanh %237 : vector<8x32xf32>
    %239 = arith.mulf %234, %238 : vector<8x32xf32>
    %c0_109 = arith.constant 0 : index
    %c0_110 = arith.constant 0 : index
    %240 = vector.load %arg8[%c0_109, %c0_110] : memref<8x32xf32, #tpu.memory_space<vmem>>, vector<8x32xf32>
    tpu.vector_store %arg8[%c0_109, %c0_110], %237 {strides = array<i32>} : memref<8x32xf32, #tpu.memory_space<vmem>>, vector<8x32xf32>,
    %c0_111 = arith.constant 0 : index
    %c0_112 = arith.constant 0 : index
    %241 = vector.load %arg7[%c0_111, %c0_112] : memref<8x32xf32, #tpu.memory_space<vmem>>, vector<8x32xf32>
    tpu.vector_store %arg7[%c0_111, %c0_112], %239 {strides = array<i32>} : memref<8x32xf32, #tpu.memory_space<vmem>>, vector<8x32xf32>,
    %242 = vector.extract_strided_slice %239 {offsets = [0, 0], sizes = [8, 1], strides = [1, 1]} : vector<8x32xf32> to vector<8x1xf32>
    %243 = arith.index_cast %207 : i32 to index
    %c0_113 = arith.constant 0 : index
    %244 = vector.load %arg5[%243, %c0_113] : memref<64x1xf32, #tpu.memory_space<vmem>>, vector<8x1xf32>
    tpu.vector_store %arg5[%243, %c0_113], %242 {strides = array<i32>} : memref<64x1xf32, #tpu.memory_space<vmem>>, vector<8x1xf32>,
    %c6_i32 = arith.constant 6 : i32
    %c8_i32_114 = arith.constant 8 : i32
    %245 = arith.muli %c6_i32, %c8_i32_114 : i32
    %246 = tpu.assume_multiple %245, 8 : i32
    %c0_115 = arith.constant 0 : index
    %c0_116 = arith.constant 0 : index
    %247 = vector.load %arg7[%c0_115, %c0_116] : memref<8x32xf32, #tpu.memory_space<vmem>>, vector<8x32xf32>
    %c0_117 = arith.constant 0 : index
    %c0_118 = arith.constant 0 : index
    %248 = vector.load %arg8[%c0_117, %c0_118] : memref<8x32xf32, #tpu.memory_space<vmem>>, vector<8x32xf32>
    %249 = arith.index_cast %246 : i32 to index
    %c0_119 = arith.constant 0 : index
    %250 = vector.load %arg6[%249, %c0_119] : memref<64x128xf32, #tpu.memory_space<vmem>>, vector<8x128xf32>
    %c0_120 = arith.constant 0 : index
    %c0_121 = arith.constant 0 : index
    %251 = vector.load %arg3[%c0_120, %c0_121] : memref<32x128xf32, #tpu.memory_space<vmem>>, vector<32x128xf32>
    %cst_122 = arith.constant dense<0.000000e+00> : vector<8x128xf32>
    %252 = tpu.matmul %247, %251, %cst_122 {dimension_numbers = #tpu.dot_dimension_numbers<[1], [0], [0], [1], [0, 0, 1, 1], [], []>} : vector<8x32xf32>, vector<32x128xf32>, vector<8x128xf32> -> vector<8x128xf32>
    %253 = arith.addf %250, %252 : vector<8x128xf32>
    %254 = vector.extract_strided_slice %253 {offsets = [0, 0], sizes = [8, 32], strides = [1, 1]} : vector<8x128xf32> to vector<8x32xf32>
    %255 = arith.negf %254 : vector<8x32xf32>
    %256 = math.exp %255 : vector<8x32xf32>
    %cst_123 = arith.constant 1.000000e+00 : f32
    %257 = vector.broadcast %cst_123 : f32 to vector<8x32xf32>
    %258 = arith.addf %257, %256 : vector<8x32xf32>
    %259 = arith.divf %257, %258 : vector<8x32xf32>
    %260 = vector.extract_strided_slice %253 {offsets = [0, 32], sizes = [8, 32], strides = [1, 1]} : vector<8x128xf32> to vector<8x32xf32>
    %261 = arith.negf %260 : vector<8x32xf32>
    %262 = math.exp %261 : vector<8x32xf32>
    %cst_124 = arith.constant 1.000000e+00 : f32
    %263 = vector.broadcast %cst_124 : f32 to vector<8x32xf32>
    %264 = arith.addf %263, %262 : vector<8x32xf32>
    %265 = arith.divf %263, %264 : vector<8x32xf32>
    %266 = vector.extract_strided_slice %253 {offsets = [0, 64], sizes = [8, 32], strides = [1, 1]} : vector<8x128xf32> to vector<8x32xf32>
    %267 = math.tanh %266 : vector<8x32xf32>
    %268 = vector.extract_strided_slice %253 {offsets = [0, 96], sizes = [8, 32], strides = [1, 1]} : vector<8x128xf32> to vector<8x32xf32>
    %269 = arith.negf %268 : vector<8x32xf32>
    %270 = math.exp %269 : vector<8x32xf32>
    %cst_125 = arith.constant 1.000000e+00 : f32
    %271 = vector.broadcast %cst_125 : f32 to vector<8x32xf32>
    %272 = arith.addf %271, %270 : vector<8x32xf32>
    %273 = arith.divf %271, %272 : vector<8x32xf32>
    %274 = arith.mulf %265, %248 : vector<8x32xf32>
    %275 = arith.mulf %259, %267 : vector<8x32xf32>
    %276 = arith.addf %274, %275 : vector<8x32xf32>
    %277 = math.tanh %276 : vector<8x32xf32>
    %278 = arith.mulf %273, %277 : vector<8x32xf32>
    %c0_126 = arith.constant 0 : index
    %c0_127 = arith.constant 0 : index
    %279 = vector.load %arg8[%c0_126, %c0_127] : memref<8x32xf32, #tpu.memory_space<vmem>>, vector<8x32xf32>
    tpu.vector_store %arg8[%c0_126, %c0_127], %276 {strides = array<i32>} : memref<8x32xf32, #tpu.memory_space<vmem>>, vector<8x32xf32>,
    %c0_128 = arith.constant 0 : index
    %c0_129 = arith.constant 0 : index
    %280 = vector.load %arg7[%c0_128, %c0_129] : memref<8x32xf32, #tpu.memory_space<vmem>>, vector<8x32xf32>
    tpu.vector_store %arg7[%c0_128, %c0_129], %278 {strides = array<i32>} : memref<8x32xf32, #tpu.memory_space<vmem>>, vector<8x32xf32>,
    %281 = vector.extract_strided_slice %278 {offsets = [0, 0], sizes = [8, 1], strides = [1, 1]} : vector<8x32xf32> to vector<8x1xf32>
    %282 = arith.index_cast %246 : i32 to index
    %c0_130 = arith.constant 0 : index
    %283 = vector.load %arg5[%282, %c0_130] : memref<64x1xf32, #tpu.memory_space<vmem>>, vector<8x1xf32>
    tpu.vector_store %arg5[%282, %c0_130], %281 {strides = array<i32>} : memref<64x1xf32, #tpu.memory_space<vmem>>, vector<8x1xf32>,
    %c7_i32 = arith.constant 7 : i32
    %c8_i32_131 = arith.constant 8 : i32
    %284 = arith.muli %c7_i32, %c8_i32_131 : i32
    %285 = tpu.assume_multiple %284, 8 : i32
    %c0_132 = arith.constant 0 : index
    %c0_133 = arith.constant 0 : index
    %286 = vector.load %arg7[%c0_132, %c0_133] : memref<8x32xf32, #tpu.memory_space<vmem>>, vector<8x32xf32>
    %c0_134 = arith.constant 0 : index
    %c0_135 = arith.constant 0 : index
    %287 = vector.load %arg8[%c0_134, %c0_135] : memref<8x32xf32, #tpu.memory_space<vmem>>, vector<8x32xf32>
    %288 = arith.index_cast %285 : i32 to index
    %c0_136 = arith.constant 0 : index
    %289 = vector.load %arg6[%288, %c0_136] : memref<64x128xf32, #tpu.memory_space<vmem>>, vector<8x128xf32>
    %c0_137 = arith.constant 0 : index
    %c0_138 = arith.constant 0 : index
    %290 = vector.load %arg3[%c0_137, %c0_138] : memref<32x128xf32, #tpu.memory_space<vmem>>, vector<32x128xf32>
    %cst_139 = arith.constant dense<0.000000e+00> : vector<8x128xf32>
    %291 = tpu.matmul %286, %290, %cst_139 {dimension_numbers = #tpu.dot_dimension_numbers<[1], [0], [0], [1], [0, 0, 1, 1], [], []>} : vector<8x32xf32>, vector<32x128xf32>, vector<8x128xf32> -> vector<8x128xf32>
    %292 = arith.addf %289, %291 : vector<8x128xf32>
    %293 = vector.extract_strided_slice %292 {offsets = [0, 0], sizes = [8, 32], strides = [1, 1]} : vector<8x128xf32> to vector<8x32xf32>
    %294 = arith.negf %293 : vector<8x32xf32>
    %295 = math.exp %294 : vector<8x32xf32>
    %cst_140 = arith.constant 1.000000e+00 : f32
    %296 = vector.broadcast %cst_140 : f32 to vector<8x32xf32>
    %297 = arith.addf %296, %295 : vector<8x32xf32>
    %298 = arith.divf %296, %297 : vector<8x32xf32>
    %299 = vector.extract_strided_slice %292 {offsets = [0, 32], sizes = [8, 32], strides = [1, 1]} : vector<8x128xf32> to vector<8x32xf32>
    %300 = arith.negf %299 : vector<8x32xf32>
    %301 = math.exp %300 : vector<8x32xf32>
    %cst_141 = arith.constant 1.000000e+00 : f32
    %302 = vector.broadcast %cst_141 : f32 to vector<8x32xf32>
    %303 = arith.addf %302, %301 : vector<8x32xf32>
    %304 = arith.divf %302, %303 : vector<8x32xf32>
    %305 = vector.extract_strided_slice %292 {offsets = [0, 64], sizes = [8, 32], strides = [1, 1]} : vector<8x128xf32> to vector<8x32xf32>
    %306 = math.tanh %305 : vector<8x32xf32>
    %307 = vector.extract_strided_slice %292 {offsets = [0, 96], sizes = [8, 32], strides = [1, 1]} : vector<8x128xf32> to vector<8x32xf32>
    %308 = arith.negf %307 : vector<8x32xf32>
    %309 = math.exp %308 : vector<8x32xf32>
    %cst_142 = arith.constant 1.000000e+00 : f32
    %310 = vector.broadcast %cst_142 : f32 to vector<8x32xf32>
    %311 = arith.addf %310, %309 : vector<8x32xf32>
    %312 = arith.divf %310, %311 : vector<8x32xf32>
    %313 = arith.mulf %304, %287 : vector<8x32xf32>
    %314 = arith.mulf %298, %306 : vector<8x32xf32>
    %315 = arith.addf %313, %314 : vector<8x32xf32>
    %316 = math.tanh %315 : vector<8x32xf32>
    %317 = arith.mulf %312, %316 : vector<8x32xf32>
    %c0_143 = arith.constant 0 : index
    %c0_144 = arith.constant 0 : index
    %318 = vector.load %arg8[%c0_143, %c0_144] : memref<8x32xf32, #tpu.memory_space<vmem>>, vector<8x32xf32>
    tpu.vector_store %arg8[%c0_143, %c0_144], %315 {strides = array<i32>} : memref<8x32xf32, #tpu.memory_space<vmem>>, vector<8x32xf32>,
    %c0_145 = arith.constant 0 : index
    %c0_146 = arith.constant 0 : index
    %319 = vector.load %arg7[%c0_145, %c0_146] : memref<8x32xf32, #tpu.memory_space<vmem>>, vector<8x32xf32>
    tpu.vector_store %arg7[%c0_145, %c0_146], %317 {strides = array<i32>} : memref<8x32xf32, #tpu.memory_space<vmem>>, vector<8x32xf32>,
    %320 = vector.extract_strided_slice %317 {offsets = [0, 0], sizes = [8, 1], strides = [1, 1]} : vector<8x32xf32> to vector<8x1xf32>
    %321 = arith.index_cast %285 : i32 to index
    %c0_147 = arith.constant 0 : index
    %322 = vector.load %arg5[%321, %c0_147] : memref<64x1xf32, #tpu.memory_space<vmem>>, vector<8x1xf32>
    tpu.vector_store %arg5[%321, %c0_147], %320 {strides = array<i32>} : memref<64x1xf32, #tpu.memory_space<vmem>>, vector<8x1xf32>,
    %c8_i32_148 = arith.constant 8 : i32
    return
  }
  func.func @transform_0(%arg0: i32) -> (i32, i32) {
    %c0_i32 = arith.constant 0 : i32
    %c0_i32_0 = arith.constant 0 : i32
    %c0_i32_1 = arith.constant 0 : i32
    return %c0_i32, %c0_i32_0 : i32, i32
  }
  func.func @transform_1(%arg0: i32) -> (i32, i32) {
    %c0_i32 = arith.constant 0 : i32
    %c0_i32_0 = arith.constant 0 : i32
    %c0_i32_1 = arith.constant 0 : i32
    return %c0_i32, %c0_i32_0 : i32, i32
  }
  func.func @transform_2(%arg0: i32) -> (i32, i32) {
    %c0_i32 = arith.constant 0 : i32
    %c0_i32_0 = arith.constant 0 : i32
    %c0_i32_1 = arith.constant 0 : i32
    return %c0_i32, %c0_i32_0 : i32, i32
  }
  func.func @transform_3(%arg0: i32) -> (i32, i32) {
    %c0_i32 = arith.constant 0 : i32
    %c0_i32_0 = arith.constant 0 : i32
    %c0_i32_1 = arith.constant 0 : i32
    return %c0_i32, %c0_i32_0 : i32, i32
  }
  func.func @transform_4(%arg0: i32) -> (i32, i32) {
    %c0_i32 = arith.constant 0 : i32
    %c0_i32_0 = arith.constant 0 : i32
    %c0_i32_1 = arith.constant 0 : i32
    return %c0_i32, %c0_i32_0 : i32, i32
  }
}

</mosaic_0001>

<llo_original>
// kernel: tpu_custom_call.1
$region0: #{tpu_custom_call.1}
  #allocation0 [shape = 'u32[]', space=smem, size = 0x4, offset = 0x4, fixed_abs, tag = 'smem constant byte address 0x4 - core index']
  #allocation1 [shape = 'u32[72,128]{1,0:T(1,128)}', space=vmem, size = 0x9000, scoped, tag = 'internal scratch']
  #allocation2 [shape = 'f32[64,128]{1,0:T(8,128)}', space=vmem, size = 0x8000, scoped, tag = 'scratch operand']
  #allocation3 [shape = 'f32[8,32]{1,0:T(8,128)}', space=vmem, size = 0x1000, scoped, tag = 'scratch operand']
  #allocation4 [shape = 'f32[8,32]{1,0:T(8,128)}', space=vmem, size = 0x1000, scoped, tag = 'scratch operand']
  %s0 = inlined_call_operand.vmem [shape: f32[64,16], index: 0, kind: input, shape index: {}]
  %s1 = inlined_call_operand.vmem [shape: f32[16,128], index: 1, kind: input, shape index: {}]
  %s2 = inlined_call_operand.vmem [shape: f32[32,128], index: 2, kind: input, shape index: {}]
  %s3 = inlined_call_operand.vmem [shape: f32[1,128], index: 3, kind: input, shape index: {}]
  %s4 = inlined_call_operand.vmem [shape: f32[64,1], index: 4, kind: output, shape index: {}]
  %s5 = sld [smem:[#allocation0]]
  $region26: #{tpu_custom_call.1} parent=0
    _
  %s7 = ssub.s32 1, %s5
  %s8 = scalar_select 0, %s7, %s5
  // Predicated region
  $region2: #{tpu_custom_call.1} parent=0 // pred_check
    _
  $region3: #{tpu_custom_call.1} parent=0 // pred_check_branch
    %10 = sbr.rel (0) target = $region5
  $region4: #{tpu_custom_call.1} parent=0 // pred_region
    _
  $region5: #{tpu_custom_call.1} parent=0 // pred_fallthru
    _
  // Predicated region
  $region6: #{tpu_custom_call.1} parent=0 // pred_check
    _
  $region7: #{tpu_custom_call.1} parent=0 // pred_check_branch
    %12 = sbr.rel (0) target = $region9
  $region8: #{tpu_custom_call.1} parent=0 // pred_region
    _
  $region9: #{tpu_custom_call.1} parent=0 // pred_fallthru
    _
  // Predicated region
  $region10: #{tpu_custom_call.1} parent=0 // pred_check
    _
  $region11: #{tpu_custom_call.1} parent=0 // pred_check_branch
    %14 = sbr.rel (0) target = $region13
  $region12: #{tpu_custom_call.1} parent=0 // pred_region
    _
  $region13: #{tpu_custom_call.1} parent=0 // pred_fallthru
    _
  // Predicated region
  $region14: #{tpu_custom_call.1} parent=0 // pred_check
    _
  $region15: #{tpu_custom_call.1} parent=0 // pred_check_branch
    %16 = sbr.rel (0) target = $region17
  $region16: #{tpu_custom_call.1} parent=0 // pred_region
    _
  $region17: #{tpu_custom_call.1} parent=0 // pred_fallthru
    _
  %v17 = vld [vmem:[%s0] sm:$0xff]
  %v18 = vld [vmem:[%s0 + $0x8] sm:$0xff]
  %v19 = vld [vmem:[%s0 + $0x10] sm:$0xff]
  %v20 = vld [vmem:[%s0 + $0x18] sm:$0xff]
  %v21 = vld [vmem:[%s0 + $0x20] sm:$0xff]
  %v22 = vld [vmem:[%s0 + $0x28] sm:$0xff]
  %v23 = vld [vmem:[%s0 + $0x30] sm:$0xff]
  %v24 = vld [vmem:[%s0 + $0x38] sm:$0xff]
  %v25 = vld [vmem:[%s1] sm:$0xff]
  %v26 = vld [vmem:[%s1 + $0x8] sm:$0xff]
  %v27 = vld [vmem:[%s3] sm:$0x1]
  %v29 = vperm.slane %v27, 0
  %vm31 = vcmask 130048
  %v33 = vsel %vm31, %v17, 0
  %v36 = vsel %vm31, %v18, 0
  %v39 = vsel %vm31, %v19, 0
  %v42 = vsel %vm31, %v20, 0
  %v45 = vsel %vm31, %v21, 0
  %v48 = vsel %vm31, %v22, 0
  %v51 = vsel %vm31, %v23, 0
  %v54 = vsel %vm31, %v24, 0
  %56 = vmatpush.msra.mxu0 0.0
  %57 = vmatpush.msra.mxu0 0.0
  %58 = vmatpush.msra.mxu0 0.0
  %59 = vmatpush.msra.mxu0 0.0
  %60 = vmatpush.msra.mxu0 0.0
  %61 = vmatpush.msra.mxu0 0.0
  %62 = vmatpush.msra.mxu0 0.0
  %63 = vmatpush.msra.mxu0 0.0
  %64 = vmatpush.msra.mxu0 0.0
  %65 = vmatpush.msra.mxu0 0.0
  %66 = vmatpush.msra.mxu0 0.0
  %67 = vmatpush.msra.mxu0 0.0
  %68 = vmatpush.msra.mxu0 0.0
  %69 = vmatpush.msra.mxu0 0.0
  %70 = vmatpush.msra.mxu0 %v26
  %71 = vmatpush.msra.mxu0 %v25
  %72 = vmatmul.f32.gmra.mxu0 %v33
  %v73 = vpop.f32.mrf.mxu0
  %v74 = vadd.f32 %v29, %v73
  %75 = vmatmul.f32.gmra.mxu0 %v36
  %v76 = vpop.f32.mrf.mxu0
  %v77 = vadd.f32 %v29, %v76
  %78 = vmatmul.f32.gmra.mxu0 %v39
  %v79 = vpop.f32.mrf.mxu0
  %v80 = vadd.f32 %v29, %v79
  %81 = vmatmul.f32.gmra.mxu0 %v42
  %v82 = vpop.f32.mrf.mxu0
  %v83 = vadd.f32 %v29, %v82
  %84 = vmatmul.f32.gmra.mxu0 %v45
  %v85 = vpop.f32.mrf.mxu0
  %v86 = vadd.f32 %v29, %v85
  %87 = vmatmul.f32.gmra.mxu0 %v48
  %v88 = vpop.f32.mrf.mxu0
  %v89 = vadd.f32 %v29, %v88
  %90 = vmatmul.f32.gmra.mxu0 %v51
  %v91 = vpop.f32.mrf.mxu0
  %v92 = vadd.f32 %v29, %v91
  %93 = vmatmul.f32.gmra.mxu0 %v54
  %v94 = vpop.f32.mrf.mxu0
  %v95 = vadd.f32 %v29, %v94
  %96 = vdwg.mxu0
  %97 = vst [vmem:[#allocation2] sm:$0xff] %v74
  %98 = vst [vmem:[#allocation2 + $0x8] sm:$0xff] %v77
  %99 = vst [vmem:[#allocation2 + $0x10] sm:$0xff] %v80
  %100 = vst [vmem:[#allocation2 + $0x18] sm:$0xff] %v83
  %101 = vst [vmem:[#allocation2 + $0x20] sm:$0xff] %v86
  %102 = vst [vmem:[#allocation2 + $0x28] sm:$0xff] %v89
  %103 = vst [vmem:[#allocation2 + $0x30] sm:$0xff] %v92
  %104 = vst [vmem:[#allocation2 + $0x38] sm:$0xff] %v95
  %vm105 = vcmask 261120
  %106 = vst.msk [vmem:[#allocation3] sm:$0xff] %vm105, 0.0
  %107 = vst.msk [vmem:[#allocation4] sm:$0xff] %vm105, 0.0
  %v108 = vld [vmem:[#allocation3] sm:$0xff]
  %v109 = vld [vmem:[#allocation4] sm:$0xff]
  %v110 = vld [vmem:[#allocation2] sm:$0xff]
  %v111 = vld [vmem:[%s2] sm:$0xff]
  %v112 = vld [vmem:[%s2 + $0x8] sm:$0xff]
  %v113 = vld [vmem:[%s2 + $0x10] sm:$0xff]
  %v114 = vld [vmem:[%s2 + $0x18] sm:$0xff]
  %v116 = vsel %vm105, %v108, 0
  %118 = vmatpush.msra.mxu0 0.0
  %119 = vmatpush.msra.mxu0 0.0
  %120 = vmatpush.msra.mxu0 0.0
  %121 = vmatpush.msra.mxu0 0.0
  %122 = vmatpush.msra.mxu0 0.0
  %123 = vmatpush.msra.mxu0 0.0
  %124 = vmatpush.msra.mxu0 0.0
  %125 = vmatpush.msra.mxu0 0.0
  %126 = vmatpush.msra.mxu0 0.0
  %127 = vmatpush.msra.mxu0 0.0
  %128 = vmatpush.msra.mxu0 0.0
  %129 = vmatpush.msra.mxu0 0.0
  %130 = vmatpush.msra.mxu0 %v114
  %131 = vmatpush.msra.mxu0 %v113
  %132 = vmatpush.msra.mxu0 %v112
  %133 = vmatpush.msra.mxu0 %v111
  %134 = vmatmul.f32.gmra.mxu0 %v116
  %v135 = vpop.f32.mrf.mxu0
  %v136 = vadd.f32 0.0, %v135
  %137 = vdwg.mxu0
  %v138 = vadd.f32 %v110, %v136
  %v139 = vxor.u32 %v138, 2147483648
  %v140 = vmul.f32 %v139, 1.442695
  %v141 = vpow.pop %v140
  %v142 = vadd.f32 %v141, 1.0
  %v143 = vrcp.pop %v142
  %v144 = vmul.f32 %v142, %v143
  %v145 = vsub.f32 1.0, %v144
  %v146 = vmul.f32 %v143, %v145
  %v147 = vadd.f32 %v143, %v146
  %vm148 = vweird.f32 %v142
  %vm149 = vweird.f32 %v143
  %vm150 = vmor %vm148, %vm149
  %v151 = vsel %vm150, %v143, %v147
  %v152 = vand.u32 2147483647, %v142
  %vm153 = vcmp.eq.f32.partialorder %v152, 8.507059e+37
  %v154 = vand.u32 %v142, 2147483648
  %v155 = vor.u32 1.1754944e-38, %v154
  %v156 = vsel %vm153, %v155, %v151
  %v157 = vmul.f32 1.0, %v156
  %v158 = vtanh.pop %v138
  %160 = vrot.lane.b32.xlu0 %v109, 32
  %v161 = vpop.permute.xlu0 %160
  %v163 = vmul.f32 %v157, %v161
  %165 = vrot.lane.b32.xlu0 %v158, 64
  %v166 = vpop.permute.xlu0 %165
  %v168 = vmul.f32 %v157, %v166
  %170 = vrot.lane.b32.xlu0 %v168, 32
  %v171 = vpop.permute.xlu0 %170
  %v173 = vadd.f32 %v163, %v171
  %v174 = vtanh.pop %v173
  %176 = vrot.lane.b32.xlu0 %v174, 64
  %v177 = vpop.permute.xlu0 %176
  %v179 = vmul.f32 %v157, %v177
  %181 = vrot.lane.b32.xlu0 %v173, 96
  %v182 = vpop.permute.xlu0 %181
  %184 = vst.msk [vmem:[#allocation4] sm:$0xff] %vm105, %v182
  %186 = vrot.lane.b32.xlu0 %v179, 32
  %v187 = vpop.permute.xlu0 %186
  %189 = vst.msk [vmem:[#allocation3] sm:$0xff] %vm105, %v187
  %vm190 = vcmask 7168
  %191 = vst.msk [vmem:[%s4] sm:$0xff] %vm190, %v187
  %v192 = vld [vmem:[#allocation3] sm:$0xff]
  %v193 = vld [vmem:[#allocation4] sm:$0xff]
  %s194 = scalar_lea.vmem [#allocation2], 8
  %v195 = vld [vmem:[%s194] sm:$0xff]
  %v196 = vld [vmem:[%s2] sm:$0xff]
  %v197 = vld [vmem:[%s2 + $0x8] sm:$0xff]
  %v198 = vld [vmem:[%s2 + $0x10] sm:$0xff]
  %v199 = vld [vmem:[%s2 + $0x18] sm:$0xff]
  %v201 = vsel %vm105, %v192, 0
  %203 = vmatpush.msra.mxu0 0.0
  %204 = vmatpush.msra.mxu0 0.0
  %205 = vmatpush.msra.mxu0 0.0
  %206 = vmatpush.msra.mxu0 0.0
  %207 = vmatpush.msra.mxu0 0.0
  %208 = vmatpush.msra.mxu0 0.0
  %209 = vmatpush.msra.mxu0 0.0
  %210 = vmatpush.msra.mxu0 0.0
  %211 = vmatpush.msra.mxu0 0.0
  %212 = vmatpush.msra.mxu0 0.0
  %213 = vmatpush.msra.mxu0 0.0
  %214 = vmatpush.msra.mxu0 0.0
  %215 = vmatpush.msra.mxu0 %v199
  %216 = vmatpush.msra.mxu0 %v198
  %217 = vmatpush.msra.mxu0 %v197
  %218 = vmatpush.msra.mxu0 %v196
  %219 = vmatmul.f32.gmra.mxu0 %v201
  %v220 = vpop.f32.mrf.mxu0
  %v221 = vadd.f32 0.0, %v220
  %222 = vdwg.mxu0
  %v223 = vadd.f32 %v195, %v221
  %v224 = vxor.u32 %v223, 2147483648
  %v225 = vmul.f32 %v224, 1.442695
  %v226 = vpow.pop %v225
  %v227 = vadd.f32 %v226, 1.0
  %v228 = vrcp.pop %v227
  %v229 = vmul.f32 %v227, %v228
  %v230 = vsub.f32 1.0, %v229
  %v231 = vmul.f32 %v228, %v230
  %v232 = vadd.f32 %v228, %v231
  %vm233 = vweird.f32 %v227
  %vm234 = vweird.f32 %v228
  %vm235 = vmor %vm233, %vm234
  %v236 = vsel %vm235, %v228, %v232
  %v237 = vand.u32 2147483647, %v227
  %vm238 = vcmp.eq.f32.partialorder %v237, 8.507059e+37
  %v239 = vand.u32 %v227, 2147483648
  %v240 = vor.u32 1.1754944e-38, %v239
  %v241 = vsel %vm238, %v240, %v236
  %v242 = vmul.f32 1.0, %v241
  %v243 = vtanh.pop %v223
  %245 = vrot.lane.b32.xlu0 %v193, 32
  %v246 = vpop.permute.xlu0 %245
  %v248 = vmul.f32 %v242, %v246
  %250 = vrot.lane.b32.xlu0 %v243, 64
  %v251 = vpop.permute.xlu0 %250
  %v253 = vmul.f32 %v242, %v251
  %255 = vrot.lane.b32.xlu0 %v253, 32
  %v256 = vpop.permute.xlu0 %255
  %v258 = vadd.f32 %v248, %v256
  %v259 = vtanh.pop %v258
  %261 = vrot.lane.b32.xlu0 %v259, 64
  %v262 = vpop.permute.xlu0 %261
  %v264 = vmul.f32 %v242, %v262
  %266 = vrot.lane.b32.xlu0 %v258, 96
  %v267 = vpop.permute.xlu0 %266
  %269 = vst.msk [vmem:[#allocation4] sm:$0xff] %vm105, %v267
  %271 = vrot.lane.b32.xlu0 %v264, 32
  %v272 = vpop.permute.xlu0 %271
  %274 = vst.msk [vmem:[#allocation3] sm:$0xff] %vm105, %v272
  %s275 = scalar_lea.vmem %s4, 8
  %276 = vst.msk [vmem:[%s275] sm:$0xff] %vm190, %v272
  %v277 = vld [vmem:[#allocation3] sm:$0xff]
  %v278 = vld [vmem:[#allocation4] sm:$0xff]
  %s279 = scalar_lea.vmem [#allocation2], 16
  %v280 = vld [vmem:[%s279] sm:$0xff]
  %v281 = vld [vmem:[%s2] sm:$0xff]
  %v282 = vld [vmem:[%s2 + $0x8] sm:$0xff]
  %v283 = vld [vmem:[%s2 + $0x10] sm:$0xff]
  %v284 = vld [vmem:[%s2 + $0x18] sm:$0xff]
  %v286 = vsel %vm105, %v277, 0
  %288 = vmatpush.msra.mxu0 0.0
  %289 = vmatpush.msra.mxu0 0.0
  %290 = vmatpush.msra.mxu0 0.0
  %291 = vmatpush.msra.mxu0 0.0
  %292 = vmatpush.msra.mxu0 0.0
  %293 = vmatpush.msra.mxu0 0.0
  %294 = vmatpush.msra.mxu0 0.0
  %295 = vmatpush.msra.mxu0 0.0
  %296 = vmatpush.msra.mxu0 0.0
  %297 = vmatpush.msra.mxu0 0.0
  %298 = vmatpush.msra.mxu0 0.0
  %299 = vmatpush.msra.mxu0 0.0
  %300 = vmatpush.msra.mxu0 %v284
  %301 = vmatpush.msra.mxu0 %v283
  %302 = vmatpush.msra.mxu0 %v282
  %303 = vmatpush.msra.mxu0 %v281
  %304 = vmatmul.f32.gmra.mxu0 %v286
  %v305 = vpop.f32.mrf.mxu0
  %v306 = vadd.f32 0.0, %v305
  %307 = vdwg.mxu0
  %v308 = vadd.f32 %v280, %v306
  %v309 = vxor.u32 %v308, 2147483648
  %v310 = vmul.f32 %v309, 1.442695
  %v311 = vpow.pop %v310
  %v312 = vadd.f32 %v311, 1.0
  %v313 = vrcp.pop %v312
  %v314 = vmul.f32 %v312, %v313
  %v315 = vsub.f32 1.0, %v314
  %v316 = vmul.f32 %v313, %v315
  %v317 = vadd.f32 %v313, %v316
  %vm318 = vweird.f32 %v312
  %vm319 = vweird.f32 %v313
  %vm320 = vmor %vm318, %vm319
  %v321 = vsel %vm320, %v313, %v317
  %v322 = vand.u32 2147483647, %v312
  %vm323 = vcmp.eq.f32.partialorder %v322, 8.507059e+37
  %v324 = vand.u32 %v312, 2147483648
  %v325 = vor.u32 1.1754944e-38, %v324
  %v326 = vsel %vm323, %v325, %v321
  %v327 = vmul.f32 1.0, %v326
  %v328 = vtanh.pop %v308
  %330 = vrot.lane.b32.xlu0 %v278, 32
  %v331 = vpop.permute.xlu0 %330
  %v333 = vmul.f32 %v327, %v331
  %335 = vrot.lane.b32.xlu0 %v328, 64
  %v336 = vpop.permute.xlu0 %335
  %v338 = vmul.f32 %v327, %v336
  %340 = vrot.lane.b32.xlu0 %v338, 32
  %v341 = vpop.permute.xlu0 %340
  %v343 = vadd.f32 %v333, %v341
  %v344 = vtanh.pop %v343
  %346 = vrot.lane.b32.xlu0 %v344, 64
  %v347 = vpop.permute.xlu0 %346
  %v349 = vmul.f32 %v327, %v347
  %351 = vrot.lane.b32.xlu0 %v343, 96
  %v352 = vpop.permute.xlu0 %351
  %354 = vst.msk [vmem:[#allocation4] sm:$0xff] %vm105, %v352
  %356 = vrot.lane.b32.xlu0 %v349, 32
  %v357 = vpop.permute.xlu0 %356
  %359 = vst.msk [vmem:[#allocation3] sm:$0xff] %vm105, %v357
  %s360 = scalar_lea.vmem %s4, 16
  %361 = vst.msk [vmem:[%s360] sm:$0xff] %vm190, %v357
  %v362 = vld [vmem:[#allocation3] sm:$0xff]
  %v363 = vld [vmem:[#allocation4] sm:$0xff]
  %s364 = scalar_lea.vmem [#allocation2], 24
  %v365 = vld [vmem:[%s364] sm:$0xff]
  %v366 = vld [vmem:[%s2] sm:$0xff]
  %v367 = vld [vmem:[%s2 + $0x8] sm:$0xff]
  %v368 = vld [vmem:[%s2 + $0x10] sm:$0xff]
  %v369 = vld [vmem:[%s2 + $0x18] sm:$0xff]
  %v371 = vsel %vm105, %v362, 0
  %373 = vmatpush.msra.mxu0 0.0
  %374 = vmatpush.msra.mxu0 0.0
  %375 = vmatpush.msra.mxu0 0.0
  %376 = vmatpush.msra.mxu0 0.0
  %377 = vmatpush.msra.mxu0 0.0
  %378 = vmatpush.msra.mxu0 0.0
  %379 = vmatpush.msra.mxu0 0.0
  %380 = vmatpush.msra.mxu0 0.0
  %381 = vmatpush.msra.mxu0 0.0
  %382 = vmatpush.msra.mxu0 0.0
  %383 = vmatpush.msra.mxu0 0.0
  %384 = vmatpush.msra.mxu0 0.0
  %385 = vmatpush.msra.mxu0 %v369
  %386 = vmatpush.msra.mxu0 %v368
  %387 = vmatpush.msra.mxu0 %v367
  %388 = vmatpush.msra.mxu0 %v366
  %389 = vmatmul.f32.gmra.mxu0 %v371
  %v390 = vpop.f32.mrf.mxu0
  %v391 = vadd.f32 0.0, %v390
  %392 = vdwg.mxu0
  %v393 = vadd.f32 %v365, %v391
  %v394 = vxor.u32 %v393, 2147483648
  %v395 = vmul.f32 %v394, 1.442695
  %v396 = vpow.pop %v395
  %v397 = vadd.f32 %v396, 1.0
  %v398 = vrcp.pop %v397
  %v399 = vmul.f32 %v397, %v398
  %v400 = vsub.f32 1.0, %v399
  %v401 = vmul.f32 %v398, %v400
  %v402 = vadd.f32 %v398, %v401
  %vm403 = vweird.f32 %v397
  %vm404 = vweird.f32 %v398
  %vm405 = vmor %vm403, %vm404
  %v406 = vsel %vm405, %v398, %v402
  %v407 = vand.u32 2147483647, %v397
  %vm408 = vcmp.eq.f32.partialorder %v407, 8.507059e+37
  %v409 = vand.u32 %v397, 2147483648
  %v410 = vor.u32 1.1754944e-38, %v409
  %v411 = vsel %vm408, %v410, %v406
  %v412 = vmul.f32 1.0, %v411
  %v413 = vtanh.pop %v393
  %415 = vrot.lane.b32.xlu0 %v363, 32
  %v416 = vpop.permute.xlu0 %415
  %v418 = vmul.f32 %v412, %v416
  %420 = vrot.lane.b32.xlu0 %v413, 64
  %v421 = vpop.permute.xlu0 %420
  %v423 = vmul.f32 %v412, %v421
  %425 = vrot.lane.b32.xlu0 %v423, 32
  %v426 = vpop.permute.xlu0 %425
  %v428 = vadd.f32 %v418, %v426
  %v429 = vtanh.pop %v428
  %431 = vrot.lane.b32.xlu0 %v429, 64
  %v432 = vpop.permute.xlu0 %431
  %v434 = vmul.f32 %v412, %v432
  %436 = vrot.lane.b32.xlu0 %v428, 96
  %v437 = vpop.permute.xlu0 %436
  %439 = vst.msk [vmem:[#allocation4] sm:$0xff] %vm105, %v437
  %441 = vrot.lane.b32.xlu0 %v434, 32
  %v442 = vpop.permute.xlu0 %441
  %444 = vst.msk [vmem:[#allocation3] sm:$0xff] %vm105, %v442
  %s445 = scalar_lea.vmem %s4, 24
  %446 = vst.msk [vmem:[%s445] sm:$0xff] %vm190, %v442
  %v447 = vld [vmem:[#allocation3] sm:$0xff]
  %v448 = vld [vmem:[#allocation4] sm:$0xff]
  %s449 = scalar_lea.vmem [#allocation2], 32
  %v450 = vld [vmem:[%s449] sm:$0xff]
  %v451 = vld [vmem:[%s2] sm:$0xff]
  %v452 = vld [vmem:[%s2 + $0x8] sm:$0xff]
  %v453 = vld [vmem:[%s2 + $0x10] sm:$0xff]
  %v454 = vld [vmem:[%s2 + $0x18] sm:$0xff]
  %v456 = vsel %vm105, %v447, 0
  %458 = vmatpush.msra.mxu0 0.0
  %459 = vmatpush.msra.mxu0 0.0
  %460 = vmatpush.msra.mxu0 0.0
  %461 = vmatpush.msra.mxu0 0.0
  %462 = vmatpush.msra.mxu0 0.0
  %463 = vmatpush.msra.mxu0 0.0
  %464 = vmatpush.msra.mxu0 0.0
  %465 = vmatpush.msra.mxu0 0.0
  %466 = vmatpush.msra.mxu0 0.0
  %467 = vmatpush.msra.mxu0 0.0
  %468 = vmatpush.msra.mxu0 0.0
  %469 = vmatpush.msra.mxu0 0.0
  %470 = vmatpush.msra.mxu0 %v454
  %471 = vmatpush.msra.mxu0 %v453
  %472 = vmatpush.msra.mxu0 %v452
  %473 = vmatpush.msra.mxu0 %v451
  %474 = vmatmul.f32.gmra.mxu0 %v456
  %v475 = vpop.f32.mrf.mxu0
  %v476 = vadd.f32 0.0, %v475
  %477 = vdwg.mxu0
  %v478 = vadd.f32 %v450, %v476
  %v479 = vxor.u32 %v478, 2147483648
  %v480 = vmul.f32 %v479, 1.442695
  %v481 = vpow.pop %v480
  %v482 = vadd.f32 %v481, 1.0
  %v483 = vrcp.pop %v482
  %v484 = vmul.f32 %v482, %v483
  %v485 = vsub.f32 1.0, %v484
  %v486 = vmul.f32 %v483, %v485
  %v487 = vadd.f32 %v483, %v486
  %vm488 = vweird.f32 %v482
  %vm489 = vweird.f32 %v483
  %vm490 = vmor %vm488, %vm489
  %v491 = vsel %vm490, %v483, %v487
  %v492 = vand.u32 2147483647, %v482
  %vm493 = vcmp.eq.f32.partialorder %v492, 8.507059e+37
  %v494 = vand.u32 %v482, 2147483648
  %v495 = vor.u32 1.1754944e-38, %v494
  %v496 = vsel %vm493, %v495, %v491
  %v497 = vmul.f32 1.0, %v496
  %v498 = vtanh.pop %v478
  %500 = vrot.lane.b32.xlu0 %v448, 32
  %v501 = vpop.permute.xlu0 %500
  %v503 = vmul.f32 %v497, %v501
  %505 = vrot.lane.b32.xlu0 %v498, 64
  %v506 = vpop.permute.xlu0 %505
  %v508 = vmul.f32 %v497, %v506
  %510 = vrot.lane.b32.xlu0 %v508, 32
  %v511 = vpop.permute.xlu0 %510
  %v513 = vadd.f32 %v503, %v511
  %v514 = vtanh.pop %v513
  %516 = vrot.lane.b32.xlu0 %v514, 64
  %v517 = vpop.permute.xlu0 %516
  %v519 = vmul.f32 %v497, %v517
  %521 = vrot.lane.b32.xlu0 %v513, 96
  %v522 = vpop.permute.xlu0 %521
  %524 = vst.msk [vmem:[#allocation4] sm:$0xff] %vm105, %v522
  %526 = vrot.lane.b32.xlu0 %v519, 32
  %v527 = vpop.permute.xlu0 %526
  %529 = vst.msk [vmem:[#allocation3] sm:$0xff] %vm105, %v527
  %s530 = scalar_lea.vmem %s4, 32
  %531 = vst.msk [vmem:[%s530] sm:$0xff] %vm190, %v527
  %v532 = vld [vmem:[#allocation3] sm:$0xff]
  %v533 = vld [vmem:[#allocation4] sm:$0xff]
  %s534 = scalar_lea.vmem [#allocation2], 40
  %v535 = vld [vmem:[%s534] sm:$0xff]
  %v536 = vld [vmem:[%s2] sm:$0xff]
  %v537 = vld [vmem:[%s2 + $0x8] sm:$0xff]
  %v538 = vld [vmem:[%s2 + $0x10] sm:$0xff]
  %v539 = vld [vmem:[%s2 + $0x18] sm:$0xff]
  %v541 = vsel %vm105, %v532, 0
  %543 = vmatpush.msra.mxu0 0.0
  %544 = vmatpush.msra.mxu0 0.0
  %545 = vmatpush.msra.mxu0 0.0
  %546 = vmatpush.msra.mxu0 0.0
  %547 = vmatpush.msra.mxu0 0.0
  %548 = vmatpush.msra.mxu0 0.0
  %549 = vmatpush.msra.mxu0 0.0
  %550 = vmatpush.msra.mxu0 0.0
  %551 = vmatpush.msra.mxu0 0.0
  %552 = vmatpush.msra.mxu0 0.0
  %553 = vmatpush.msra.mxu0 0.0
  %554 = vmatpush.msra.mxu0 0.0
  %555 = vmatpush.msra.mxu0 %v539
  %556 = vmatpush.msra.mxu0 %v538
  %557 = vmatpush.msra.mxu0 %v537
  %558 = vmatpush.msra.mxu0 %v536
  %559 = vmatmul.f32.gmra.mxu0 %v541
  %v560 = vpop.f32.mrf.mxu0
  %v561 = vadd.f32 0.0, %v560
  %562 = vdwg.mxu0
  %v563 = vadd.f32 %v535, %v561
  %v564 = vxor.u32 %v563, 2147483648
  %v565 = vmul.f32 %v564, 1.442695
  %v566 = vpow.pop %v565
  %v567 = vadd.f32 %v566, 1.0
  %v568 = vrcp.pop %v567
  %v569 = vmul.f32 %v567, %v568
  %v570 = vsub.f32 1.0, %v569
  %v571 = vmul.f32 %v568, %v570
  %v572 = vadd.f32 %v568, %v571
  %vm573 = vweird.f32 %v567
  %vm574 = vweird.f32 %v568
  %vm575 = vmor %vm573, %vm574
  %v576 = vsel %vm575, %v568, %v572
  %v577 = vand.u32 2147483647, %v567
  %vm578 = vcmp.eq.f32.partialorder %v577, 8.507059e+37
  %v579 = vand.u32 %v567, 2147483648
  %v580 = vor.u32 1.1754944e-38, %v579
  %v581 = vsel %vm578, %v580, %v576
  %v582 = vmul.f32 1.0, %v581
  %v583 = vtanh.pop %v563
  %585 = vrot.lane.b32.xlu0 %v533, 32
  %v586 = vpop.permute.xlu0 %585
  %v588 = vmul.f32 %v582, %v586
  %590 = vrot.lane.b32.xlu0 %v583, 64
  %v591 = vpop.permute.xlu0 %590
  %v593 = vmul.f32 %v582, %v591
  %595 = vrot.lane.b32.xlu0 %v593, 32
  %v596 = vpop.permute.xlu0 %595
  %v598 = vadd.f32 %v588, %v596
  %v599 = vtanh.pop %v598
  %601 = vrot.lane.b32.xlu0 %v599, 64
  %v602 = vpop.permute.xlu0 %601
  %v604 = vmul.f32 %v582, %v602
  %606 = vrot.lane.b32.xlu0 %v598, 96
  %v607 = vpop.permute.xlu0 %606
  %609 = vst.msk [vmem:[#allocation4] sm:$0xff] %vm105, %v607
  %611 = vrot.lane.b32.xlu0 %v604, 32
  %v612 = vpop.permute.xlu0 %611
  %614 = vst.msk [vmem:[#allocation3] sm:$0xff] %vm105, %v612
  %s615 = scalar_lea.vmem %s4, 40
  %616 = vst.msk [vmem:[%s615] sm:$0xff] %vm190, %v612
  %v617 = vld [vmem:[#allocation3] sm:$0xff]
  %v618 = vld [vmem:[#allocation4] sm:$0xff]
  %s619 = scalar_lea.vmem [#allocation2], 48
  %v620 = vld [vmem:[%s619] sm:$0xff]
  %v621 = vld [vmem:[%s2] sm:$0xff]
  %v622 = vld [vmem:[%s2 + $0x8] sm:$0xff]
  %v623 = vld [vmem:[%s2 + $0x10] sm:$0xff]
  %v624 = vld [vmem:[%s2 + $0x18] sm:$0xff]
  %v626 = vsel %vm105, %v617, 0
  %628 = vmatpush.msra.mxu0 0.0
  %629 = vmatpush.msra.mxu0 0.0
  %630 = vmatpush.msra.mxu0 0.0
  %631 = vmatpush.msra.mxu0 0.0
  %632 = vmatpush.msra.mxu0 0.0
  %633 = vmatpush.msra.mxu0 0.0
  %634 = vmatpush.msra.mxu0 0.0
  %635 = vmatpush.msra.mxu0 0.0
  %636 = vmatpush.msra.mxu0 0.0
  %637 = vmatpush.msra.mxu0 0.0
  %638 = vmatpush.msra.mxu0 0.0
  %639 = vmatpush.msra.mxu0 0.0
  %640 = vmatpush.msra.mxu0 %v624
  %641 = vmatpush.msra.mxu0 %v623
  %642 = vmatpush.msra.mxu0 %v622
  %643 = vmatpush.msra.mxu0 %v621
  %644 = vmatmul.f32.gmra.mxu0 %v626
  %v645 = vpop.f32.mrf.mxu0
  %v646 = vadd.f32 0.0, %v645
  %647 = vdwg.mxu0
  %v648 = vadd.f32 %v620, %v646
  %v649 = vxor.u32 %v648, 2147483648
  %v650 = vmul.f32 %v649, 1.442695
  %v651 = vpow.pop %v650
  %v652 = vadd.f32 %v651, 1.0
  %v653 = vrcp.pop %v652
  %v654 = vmul.f32 %v652, %v653
  %v655 = vsub.f32 1.0, %v654
  %v656 = vmul.f32 %v653, %v655
  %v657 = vadd.f32 %v653, %v656
  %vm658 = vweird.f32 %v652
  %vm659 = vweird.f32 %v653
  %vm660 = vmor %vm658, %vm659
  %v661 = vsel %vm660, %v653, %v657
  %v662 = vand.u32 2147483647, %v652
  %vm663 = vcmp.eq.f32.partialorder %v662, 8.507059e+37
  %v664 = vand.u32 %v652, 2147483648
  %v665 = vor.u32 1.1754944e-38, %v664
  %v666 = vsel %vm663, %v665, %v661
  %v667 = vmul.f32 1.0, %v666
  %v668 = vtanh.pop %v648
  %670 = vrot.lane.b32.xlu0 %v618, 32
  %v671 = vpop.permute.xlu0 %670
  %v673 = vmul.f32 %v667, %v671
  %675 = vrot.lane.b32.xlu0 %v668, 64
  %v676 = vpop.permute.xlu0 %675
  %v678 = vmul.f32 %v667, %v676
  %680 = vrot.lane.b32.xlu0 %v678, 32
  %v681 = vpop.permute.xlu0 %680
  %v683 = vadd.f32 %v673, %v681
  %v684 = vtanh.pop %v683
  %686 = vrot.lane.b32.xlu0 %v684, 64
  %v687 = vpop.permute.xlu0 %686
  %v689 = vmul.f32 %v667, %v687
  %691 = vrot.lane.b32.xlu0 %v683, 96
  %v692 = vpop.permute.xlu0 %691
  %694 = vst.msk [vmem:[#allocation4] sm:$0xff] %vm105, %v692
  %696 = vrot.lane.b32.xlu0 %v689, 32
  %v697 = vpop.permute.xlu0 %696
  %699 = vst.msk [vmem:[#allocation3] sm:$0xff] %vm105, %v697
  %s700 = scalar_lea.vmem %s4, 48
  %701 = vst.msk [vmem:[%s700] sm:$0xff] %vm190, %v697
  %v702 = vld [vmem:[#allocation3] sm:$0xff]
  %v703 = vld [vmem:[#allocation4] sm:$0xff]
  %s704 = scalar_lea.vmem [#allocation2], 56
  %v705 = vld [vmem:[%s704] sm:$0xff]
  %v706 = vld [vmem:[%s2] sm:$0xff]
  %v707 = vld [vmem:[%s2 + $0x8] sm:$0xff]
  %v708 = vld [vmem:[%s2 + $0x10] sm:$0xff]
  %v709 = vld [vmem:[%s2 + $0x18] sm:$0xff]
  %v711 = vsel %vm105, %v702, 0
  %713 = vmatpush.msra.mxu0 0.0
  %714 = vmatpush.msra.mxu0 0.0
  %715 = vmatpush.msra.mxu0 0.0
  %716 = vmatpush.msra.mxu0 0.0
  %717 = vmatpush.msra.mxu0 0.0
  %718 = vmatpush.msra.mxu0 0.0
  %719 = vmatpush.msra.mxu0 0.0
  %720 = vmatpush.msra.mxu0 0.0
  %721 = vmatpush.msra.mxu0 0.0
  %722 = vmatpush.msra.mxu0 0.0
  %723 = vmatpush.msra.mxu0 0.0
  %724 = vmatpush.msra.mxu0 0.0
  %725 = vmatpush.msra.mxu0 %v709
  %726 = vmatpush.msra.mxu0 %v708
  %727 = vmatpush.msra.mxu0 %v707
  %728 = vmatpush.msra.mxu0 %v706
  %729 = vmatmul.f32.gmra.mxu0 %v711
  %v730 = vpop.f32.mrf.mxu0
  %v731 = vadd.f32 0.0, %v730
  %732 = vdwg.mxu0
  %v733 = vadd.f32 %v705, %v731
  %v734 = vxor.u32 %v733, 2147483648
  %v735 = vmul.f32 %v734, 1.442695
  %v736 = vpow.pop %v735
  %v737 = vadd.f32 %v736, 1.0
  %v738 = vrcp.pop %v737
  %v739 = vmul.f32 %v737, %v738
  %v740 = vsub.f32 1.0, %v739
  %v741 = vmul.f32 %v738, %v740
  %v742 = vadd.f32 %v738, %v741
  %vm743 = vweird.f32 %v737
  %vm744 = vweird.f32 %v738
  %vm745 = vmor %vm743, %vm744
  %v746 = vsel %vm745, %v738, %v742
  %v747 = vand.u32 2147483647, %v737
  %vm748 = vcmp.eq.f32.partialorder %v747, 8.507059e+37
  %v749 = vand.u32 %v737, 2147483648
  %v750 = vor.u32 1.1754944e-38, %v749
  %v751 = vsel %vm748, %v750, %v746
  %v752 = vmul.f32 1.0, %v751
  %v753 = vtanh.pop %v733
  %755 = vrot.lane.b32.xlu0 %v703, 32
  %v756 = vpop.permute.xlu0 %755
  %v758 = vmul.f32 %v752, %v756
  %760 = vrot.lane.b32.xlu0 %v753, 64
  %v761 = vpop.permute.xlu0 %760
  %v763 = vmul.f32 %v752, %v761
  %765 = vrot.lane.b32.xlu0 %v763, 32
  %v766 = vpop.permute.xlu0 %765
  %v768 = vadd.f32 %v758, %v766
  %v769 = vtanh.pop %v768
  %771 = vrot.lane.b32.xlu0 %v769, 64
  %v772 = vpop.permute.xlu0 %771
  %v774 = vmul.f32 %v752, %v772
  %776 = vrot.lane.b32.xlu0 %v768, 96
  %v777 = vpop.permute.xlu0 %776
  %779 = vst.msk [vmem:[#allocation4] sm:$0xff] %vm105, %v777
  %781 = vrot.lane.b32.xlu0 %v774, 32
  %v782 = vpop.permute.xlu0 %781
  %784 = vst.msk [vmem:[#allocation3] sm:$0xff] %vm105, %v782
  %s785 = scalar_lea.vmem %s4, 56
  %786 = vst.msk [vmem:[%s785] sm:$0xff] %vm190, %v782
  // Predicated region
  $region18: #{tpu_custom_call.1} parent=0 // pred_check
    _
  $region19: #{tpu_custom_call.1} parent=0 // pred_check_branch
    %788 = sbr.rel (0) target = $region21
  $region20: #{tpu_custom_call.1} parent=0 // pred_region
    _
  $region21: #{tpu_custom_call.1} parent=0 // pred_fallthru
    _
  // Predicated region
  $region22: #{tpu_custom_call.1} parent=0 // pred_check
    _
  $region23: #{tpu_custom_call.1} parent=0 // pred_check_branch
    %790 = sbr.rel (0) target = $region25
  $region24: #{tpu_custom_call.1} parent=0 // pred_region
    _
  $region25: #{tpu_custom_call.1} parent=0 // pred_fallthru
    _

</llo_original>
